<compile_context>
chip_gen: v7x
topology: tpu7x:2x2x1
jax: 0.10.0
libtpu: 0.0.40
codegen_flags: <defaults>
</compile_context>

<pallas_src>
import jax
import jax.numpy as jnp
from jax.experimental import pallas as pl
from jax.experimental.pallas import tpu as pltpu

HIDDEN = 100          # fixed by the module definition
H_PAD = 128           # lane-dense padded hidden width
BN_EPS = 1e-5


def _pad_to(a, shape):
    pads = [(0, t - s) for s, t in zip(a.shape, shape)]
    return jnp.pad(a, pads)


def mlp_head_kernel(x_ref,
                    w1_ref, b1_ref, g1_ref, be1_ref,
                    w2t_ref, b2_ref, g2_ref, be2_ref,
                    w3t_ref, b3_ref,
                    o_ref):
    mm = x_ref.dtype                    # bf16 MXU operands, f32 accumulation
    inv_b = 1.0 / x_ref.shape[0]        # static batch size

    def dot_t(a, w_t):
        # a @ w_t.T : contract both operands on their last dim (MXU trans_b).
        return jax.lax.dot_general(
            a.astype(mm), w_t.astype(mm),
            dimension_numbers=(((1,), (1,)), ((), ())),
            preferred_element_type=jnp.float32)

    def bn_fold(h, gamma, beta, w_t, b):
        # Training-mode BatchNorm1d stats (biased, two-pass variance), folded
        # into the next linear layer:
        #   bn(h) @ W = h @ (scale * W) + (shift @ W + b)
        # w_t is W^T (out, in), so scaling W's rows == scaling w_t's columns,
        # which is a plain row-broadcast multiply (no relayout needed).
        mean = jnp.sum(h, axis=0, keepdims=True) * inv_b            # (1, H)
        c = h - mean
        var = jnp.sum(c * c, axis=0, keepdims=True) * inv_b         # (1, H)
        scale = gamma * jax.lax.rsqrt(var + BN_EPS)                  # (1, H)
        shift = beta - mean * scale                                  # (1, H)
        w_t_scaled = w_t * scale                                     # (N, H)
        b_folded = dot_t(shift, w_t) + b                             # (1, N)
        return w_t_scaled, b_folded

    # fc1 + ReLU   (x arrives unpadded in the matmul dtype)
    h = jnp.dot(x_ref[...], w1_ref[...],
                preferred_element_type=jnp.float32) + b1_ref[...]
    h = jnp.maximum(h, 0.0)

    # BN1 folded into fc2, then fc2 + ReLU
    w2t_s, b2_f = bn_fold(h, g1_ref[...], be1_ref[...],
                          w2t_ref[...], b2_ref[...])
    h = dot_t(h, w2t_s) + b2_f
    h = jnp.maximum(h, 0.0)

    # BN2 folded into fc3, then fc3 (output written at its natural width)
    w3t_s, b3_f = bn_fold(h, g2_ref[...], be2_ref[...],
                          w3t_ref[...], b3_ref[...])
    o_ref[...] = (dot_t(h, w3t_s) + b3_f).astype(o_ref.dtype)


def mlp_head_simple(x, params, *, matmul_dtype=jnp.bfloat16):
    """x: (B, input_dim) float32. params: dict of weights (see init_params)."""
    B, in_dim = x.shape
    out_dim = params["w3"].shape[1]

    # Only the hidden dim is zero-padded to a lane-dense 128; pads stay exact
    # zeros through ReLU/BN (zero weights/bias/gamma/beta), so results are
    # unchanged.  x and the output keep their natural widths.
    x_mm = x.astype(matmul_dtype)                               # (B, in_dim)
    w1 = _pad_to(params["w1"], (in_dim, H_PAD)).astype(matmul_dtype)
    b1 = _pad_to(params["b1"], (1, H_PAD))
    g1 = _pad_to(params["g1"], (1, H_PAD))
    be1 = _pad_to(params["be1"], (1, H_PAD))
    w2t = _pad_to(params["w2"], (H_PAD, H_PAD)).T               # (H, H)  W2^T
    b2 = _pad_to(params["b2"], (1, H_PAD))
    g2 = _pad_to(params["g2"], (1, H_PAD))
    be2 = _pad_to(params["be2"], (1, H_PAD))
    w3t = _pad_to(params["w3"], (H_PAD, out_dim)).T             # (out, H) W3^T
    b3 = params["b3"]                                           # (1, out)

    args = (x_mm, w1, b1, g1, be1, w2t, b2, g2, be2, w3t, b3)

    def full(a):
        shape = a.shape
        return pl.BlockSpec(shape, lambda: tuple(0 for _ in shape))

    # VMEM budget: single-buffered (grid=()), plus live f32 intermediates and
    # Mosaic scratch slack; cap at 85% of this generation's physical VMEM.
    in_bytes = sum(int(a.size) * a.dtype.itemsize for a in args)
    out_bytes = B * out_dim * 4
    need = in_bytes + out_bytes
    need += 6 * B * H_PAD * 4            # live f32 intermediates (h, centered, ...)
    need += 4 << 20                      # compiler scratch slack
    try:
        cap = int(pltpu.get_tpu_info().vmem_capacity_bytes)
    except Exception:
        cap = 64 << 20                   # conservative (v7x per-core size)
    vmem_limit = int(min(max(need, 8 << 20), int(cap * 0.85)))

    flops = 2 * B * (in_dim * H_PAD + H_PAD * H_PAD + H_PAD * out_dim)
    flops += 2 * (H_PAD * H_PAD + H_PAD * out_dim)       # BN-fold dots
    cost = pl.CostEstimate(flops=int(flops),
                           transcendentals=2 * H_PAD,    # rsqrt per BN feature
                           bytes_accessed=int(in_bytes + out_bytes))

    return pl.pallas_call(
        mlp_head_kernel,
        out_shape=jax.ShapeDtypeStruct((B, out_dim), jnp.float32),
        grid=(),   # single program: whole batch resident so BN stats are exact
        in_specs=[full(a) for a in args],
        out_specs=pl.BlockSpec((B, out_dim), lambda: (0, 0)),
        compiler_params=pltpu.CompilerParams(vmem_limit_bytes=vmem_limit),
        cost_estimate=cost,
    )(*args)


def init_params(key, input_dim, output_dim):
    """Deterministic synthetic parameters (shapes match the PyTorch module)."""
    ks = jax.random.split(key, 6)

    def linear(kw, kb, fan_in, fan_out):
        # PyTorch-style uniform(-1/sqrt(fan_in), 1/sqrt(fan_in))
        bound = 1.0 / jnp.sqrt(jnp.float32(fan_in))
        w = jax.random.uniform(kw, (fan_in, fan_out), jnp.float32, -bound, bound)
        b = jax.random.uniform(kb, (1, fan_out), jnp.float32, -bound, bound)
        return w, b

    w1, b1 = linear(ks[0], ks[1], input_dim, HIDDEN)
    w2, b2 = linear(ks[2], ks[3], HIDDEN, HIDDEN)
    w3, b3 = linear(ks[4], ks[5], HIDDEN, output_dim)
    return dict(
        w1=w1, b1=b1,
        g1=jnp.ones((1, HIDDEN), jnp.float32), be1=jnp.zeros((1, HIDDEN), jnp.float32),
        w2=w2, b2=b2,
        g2=jnp.ones((1, HIDDEN), jnp.float32), be2=jnp.zeros((1, HIDDEN), jnp.float32),
        w3=w3, b3=b3,
    )


def _reference_matched(x, p):
    """Mirrors the kernel math exactly (bf16-operand dots, f32 accumulation,
    two-pass BN folded into the next layer's weights)."""
    mm = jnp.bfloat16
    inv_b = 1.0 / x.shape[0]

    def dot_t(a, w_t):
        return jax.lax.dot_general(a.astype(mm), w_t.astype(mm),
                                   (((1,), (1,)), ((), ())),
                                   preferred_element_type=jnp.float32)

    def bn_fold(h, g, be, w_t, b):
        mean = jnp.sum(h, axis=0, keepdims=True) * inv_b
        c = h - mean
        var = jnp.sum(c * c, axis=0, keepdims=True) * inv_b
        scale = g * jax.lax.rsqrt(var + BN_EPS)
        shift = be - mean * scale
        return w_t * scale, dot_t(shift, w_t) + b

    h = jnp.dot(x.astype(mm), p["w1"].astype(mm),
                preferred_element_type=jnp.float32) + p["b1"]
    h = jnp.maximum(h, 0.0)
    w2t_s, b2_f = bn_fold(h, p["g1"], p["be1"], p["w2"].T, p["b2"])
    h = jnp.maximum(dot_t(h, w2t_s) + b2_f, 0.0)
    w3t_s, b3_f = bn_fold(h, p["g2"], p["be2"], p["w3"].T, p["b3"])
    return dot_t(h, w3t_s) + b3_f


def _reference_f32(x, p):
    """PyTorch-semantics reference in pure f32 (training-mode BatchNorm1d)."""
    def bn(h):
        m = h.mean(axis=0, keepdims=True)
        v = ((h - m) ** 2).mean(axis=0, keepdims=True)
        return (h - m) / jnp.sqrt(v + BN_EPS)

    h = jnp.maximum(x @ p["w1"] + p["b1"], 0.0)
    h = bn(h) * p["g1"] + p["be1"]
    h = jnp.maximum(h @ p["w2"] + p["b2"], 0.0)
    h = bn(h) * p["g2"] + p["be2"]
    return h @ p["w3"] + p["b3"]


if __name__ == "__main__":
    key = jax.random.PRNGKey(0)
    k_x, k_p = jax.random.split(key)

    batch, input_dim, output_dim = 8, 32, 10
    x = jax.random.normal(k_x, (batch, input_dim), jnp.float32)
    params = init_params(k_p, input_dim, output_dim)

    out = jax.block_until_ready(mlp_head_simple(x, params))
    assert out.shape == (batch, output_dim)

    # Exact-math check against a reference using identical bf16-operand dots
    # and the same folded-BN algebra.
    ref_matched = _reference_matched(x, params)
    assert jnp.allclose(out, ref_matched, atol=2e-3, rtol=2e-3)

    # Semantic check against the full-f32 PyTorch-equivalent forward
    # (looser tolerance to absorb bf16 matmul-operand rounding).
    ref_f32 = _reference_f32(x, params)
    assert jnp.allclose(out, ref_f32, atol=5e-2, rtol=5e-2)

    print("KERNEL_OK")
</pallas_src>

<mosaic_0001>
module attributes {stable_mosaic.version = 11 : i64} {
  func.func @mlp_head_kernel(%arg0: memref<8x32xbf16, #tpu.memory_space<vmem>>, %arg1: memref<32x128xbf16, #tpu.memory_space<vmem>>, %arg2: memref<1x128xf32, #tpu.memory_space<vmem>>, %arg3: memref<1x128xf32, #tpu.memory_space<vmem>>, %arg4: memref<1x128xf32, #tpu.memory_space<vmem>>, %arg5: memref<128x128xf32, #tpu.memory_space<vmem>>, %arg6: memref<1x128xf32, #tpu.memory_space<vmem>>, %arg7: memref<1x128xf32, #tpu.memory_space<vmem>>, %arg8: memref<1x128xf32, #tpu.memory_space<vmem>>, %arg9: memref<10x128xf32, #tpu.memory_space<vmem>>, %arg10: memref<1x10xf32, #tpu.memory_space<vmem>>, %arg11: memref<8x10xf32, #tpu.memory_space<vmem>>) attributes {dimension_semantics = [], scalar_prefetch = 0 : i64, scratch_operands = 0 : i64, tpu.core_type = #tpu.core_type<tc>} {
    %c0 = arith.constant 0 : index
    %c0_0 = arith.constant 0 : index
    %0 = vector.load %arg0[%c0, %c0_0] : memref<8x32xbf16, #tpu.memory_space<vmem>>, vector<8x32xbf16>
    %c0_1 = arith.constant 0 : index
    %c0_2 = arith.constant 0 : index
    %1 = vector.load %arg1[%c0_1, %c0_2] : memref<32x128xbf16, #tpu.memory_space<vmem>>, vector<32x128xbf16>
    %cst = arith.constant dense<0.000000e+00> : vector<8x128xf32>
    %2 = tpu.matmul %0, %1, %cst {dimension_numbers = #tpu.dot_dimension_numbers<[1], [0], [0], [1], [0, 0, 1, 1], [], []>} : vector<8x32xbf16>, vector<32x128xbf16>, vector<8x128xf32> -> vector<8x128xf32>
    %c0_3 = arith.constant 0 : index
    %c0_4 = arith.constant 0 : index
    %3 = vector.load %arg2[%c0_3, %c0_4] : memref<1x128xf32, #tpu.memory_space<vmem>>, vector<1x128xf32>
    %4 = vector.broadcast %3 : vector<1x128xf32> to vector<8x128xf32>
    %5 = arith.addf %2, %4 : vector<8x128xf32>
    %cst_5 = arith.constant 0.000000e+00 : f32
    %6 = vector.broadcast %cst_5 : f32 to vector<8x128xf32>
    %7 = arith.maximumf %5, %6 : vector<8x128xf32>
    %c0_6 = arith.constant 0 : index
    %c0_7 = arith.constant 0 : index
    %8 = vector.load %arg3[%c0_6, %c0_7] : memref<1x128xf32, #tpu.memory_space<vmem>>, vector<1x128xf32>
    %c0_8 = arith.constant 0 : index
    %c0_9 = arith.constant 0 : index
    %9 = vector.load %arg4[%c0_8, %c0_9] : memref<1x128xf32, #tpu.memory_space<vmem>>, vector<1x128xf32>
    %c0_10 = arith.constant 0 : index
    %c0_11 = arith.constant 0 : index
    %10 = vector.load %arg5[%c0_10, %c0_11] : memref<128x128xf32, #tpu.memory_space<vmem>>, vector<128x128xf32>
    %c0_12 = arith.constant 0 : index
    %c0_13 = arith.constant 0 : index
    %11 = vector.load %arg6[%c0_12, %c0_13] : memref<1x128xf32, #tpu.memory_space<vmem>>, vector<1x128xf32>
    %cst_14 = arith.constant dense<0.000000e+00> : vector<128xf32>
    %12 = vector.multi_reduction <add>, %7, %cst_14 [0] : vector<8x128xf32> to vector<128xf32>
    %13 = vector.shape_cast %12 : vector<128xf32> to vector<1x128xf32>
    %cst_15 = arith.constant 1.250000e-01 : f32
    %14 = vector.broadcast %cst_15 : f32 to vector<1x128xf32>
    %15 = arith.mulf %13, %14 : vector<1x128xf32>
    %16 = vector.broadcast %15 : vector<1x128xf32> to vector<8x128xf32>
    %17 = arith.subf %7, %16 : vector<8x128xf32>
    %18 = arith.mulf %17, %17 : vector<8x128xf32>
    %cst_16 = arith.constant dense<0.000000e+00> : vector<128xf32>
    %19 = vector.multi_reduction <add>, %18, %cst_16 [0] : vector<8x128xf32> to vector<128xf32>
    %20 = vector.shape_cast %19 : vector<128xf32> to vector<1x128xf32>
    %cst_17 = arith.constant 1.250000e-01 : f32
    %21 = vector.broadcast %cst_17 : f32 to vector<1x128xf32>
    %22 = arith.mulf %20, %21 : vector<1x128xf32>
    %cst_18 = arith.constant 9.99999974E-6 : f32
    %23 = vector.broadcast %cst_18 : f32 to vector<1x128xf32>
    %24 = arith.addf %22, %23 : vector<1x128xf32>
    %25 = math.rsqrt %24 : vector<1x128xf32>
    %26 = arith.mulf %8, %25 : vector<1x128xf32>
    %27 = arith.mulf %15, %26 : vector<1x128xf32>
    %28 = arith.subf %9, %27 : vector<1x128xf32>
    %29 = vector.broadcast %26 : vector<1x128xf32> to vector<128x128xf32>
    %30 = arith.mulf %10, %29 : vector<128x128xf32>
    %31 = arith.truncf %28 : vector<1x128xf32> to vector<1x128xbf16>
    %32 = arith.truncf %10 : vector<128x128xf32> to vector<128x128xbf16>
    %cst_19 = arith.constant dense<0.000000e+00> : vector<1x128xf32>
    %33 = tpu.matmul %31, %32, %cst_19 {dimension_numbers = #tpu.dot_dimension_numbers<[1], [1], [0], [0], [0, 0, 1, 0], [], []>} : vector<1x128xbf16>, vector<128x128xbf16>, vector<1x128xf32> -> vector<1x128xf32>
    %34 = arith.addf %33, %11 : vector<1x128xf32>
    %35 = arith.truncf %7 : vector<8x128xf32> to vector<8x128xbf16>
    %36 = arith.truncf %30 : vector<128x128xf32> to vector<128x128xbf16>
    %cst_20 = arith.constant dense<0.000000e+00> : vector<8x128xf32>
    %37 = tpu.matmul %35, %36, %cst_20 {dimension_numbers = #tpu.dot_dimension_numbers<[1], [1], [0], [0], [0, 0, 1, 0], [], []>} : vector<8x128xbf16>, vector<128x128xbf16>, vector<8x128xf32> -> vector<8x128xf32>
    %38 = vector.broadcast %34 : vector<1x128xf32> to vector<8x128xf32>
    %39 = arith.addf %37, %38 : vector<8x128xf32>
    %cst_21 = arith.constant 0.000000e+00 : f32
    %40 = vector.broadcast %cst_21 : f32 to vector<8x128xf32>
    %41 = arith.maximumf %39, %40 : vector<8x128xf32>
    %c0_22 = arith.constant 0 : index
    %c0_23 = arith.constant 0 : index
    %42 = vector.load %arg7[%c0_22, %c0_23] : memref<1x128xf32, #tpu.memory_space<vmem>>, vector<1x128xf32>
    %c0_24 = arith.constant 0 : index
    %c0_25 = arith.constant 0 : index
    %43 = vector.load %arg8[%c0_24, %c0_25] : memref<1x128xf32, #tpu.memory_space<vmem>>, vector<1x128xf32>
    %c0_26 = arith.constant 0 : index
    %c0_27 = arith.constant 0 : index
    %44 = vector.load %arg9[%c0_26, %c0_27] : memref<10x128xf32, #tpu.memory_space<vmem>>, vector<10x128xf32>
    %c0_28 = arith.constant 0 : index
    %c0_29 = arith.constant 0 : index
    %45 = vector.load %arg10[%c0_28, %c0_29] : memref<1x10xf32, #tpu.memory_space<vmem>>, vector<1x10xf32>
    %cst_30 = arith.constant dense<0.000000e+00> : vector<128xf32>
    %46 = vector.multi_reduction <add>, %41, %cst_30 [0] : vector<8x128xf32> to vector<128xf32>
    %47 = vector.shape_cast %46 : vector<128xf32> to vector<1x128xf32>
    %cst_31 = arith.constant 1.250000e-01 : f32
    %48 = vector.broadcast %cst_31 : f32 to vector<1x128xf32>
    %49 = arith.mulf %47, %48 : vector<1x128xf32>
    %50 = vector.broadcast %49 : vector<1x128xf32> to vector<8x128xf32>
    %51 = arith.subf %41, %50 : vector<8x128xf32>
    %52 = arith.mulf %51, %51 : vector<8x128xf32>
    %cst_32 = arith.constant dense<0.000000e+00> : vector<128xf32>
    %53 = vector.multi_reduction <add>, %52, %cst_32 [0] : vector<8x128xf32> to vector<128xf32>
    %54 = vector.shape_cast %53 : vector<128xf32> to vector<1x128xf32>
    %cst_33 = arith.constant 1.250000e-01 : f32
    %55 = vector.broadcast %cst_33 : f32 to vector<1x128xf32>
    %56 = arith.mulf %54, %55 : vector<1x128xf32>
    %cst_34 = arith.constant 9.99999974E-6 : f32
    %57 = vector.broadcast %cst_34 : f32 to vector<1x128xf32>
    %58 = arith.addf %56, %57 : vector<1x128xf32>
    %59 = math.rsqrt %58 : vector<1x128xf32>
    %60 = arith.mulf %42, %59 : vector<1x128xf32>
    %61 = arith.mulf %49, %60 : vector<1x128xf32>
    %62 = arith.subf %43, %61 : vector<1x128xf32>
    %63 = vector.broadcast %60 : vector<1x128xf32> to vector<10x128xf32>
    %64 = arith.mulf %44, %63 : vector<10x128xf32>
    %65 = arith.truncf %62 : vector<1x128xf32> to vector<1x128xbf16>
    %66 = arith.truncf %44 : vector<10x128xf32> to vector<10x128xbf16>
    %cst_35 = arith.constant dense<0.000000e+00> : vector<1x10xf32>
    %67 = tpu.matmul %65, %66, %cst_35 {dimension_numbers = #tpu.dot_dimension_numbers<[1], [1], [0], [0], [0, 0, 1, 0], [], []>} : vector<1x128xbf16>, vector<10x128xbf16>, vector<1x10xf32> -> vector<1x10xf32>
    %68 = arith.addf %67, %45 : vector<1x10xf32>
    %69 = arith.truncf %41 : vector<8x128xf32> to vector<8x128xbf16>
    %70 = arith.truncf %64 : vector<10x128xf32> to vector<10x128xbf16>
    %cst_36 = arith.constant dense<0.000000e+00> : vector<8x10xf32>
    %71 = tpu.matmul %69, %70, %cst_36 {dimension_numbers = #tpu.dot_dimension_numbers<[1], [1], [0], [0], [0, 0, 1, 0], [], []>} : vector<8x128xbf16>, vector<10x128xbf16>, vector<8x10xf32> -> vector<8x10xf32>
    %72 = vector.broadcast %68 : vector<1x10xf32> to vector<8x10xf32>
    %73 = arith.addf %71, %72 : vector<8x10xf32>
    %c0_37 = arith.constant 0 : index
    %c0_38 = arith.constant 0 : index
    %74 = vector.load %arg11[%c0_37, %c0_38] : memref<8x10xf32, #tpu.memory_space<vmem>>, vector<8x10xf32>
    tpu.vector_store %arg11[%c0_37, %c0_38], %73 {strides = array<i32>} : memref<8x10xf32, #tpu.memory_space<vmem>>, vector<8x10xf32>,
    return
  }
}

</mosaic_0001>

<llo_original>
// kernel: tpu_custom_call.1
$region0: #{tpu_custom_call.1}
  #allocation0 [shape = 'u32[]', space=smem, size = 0x4, offset = 0x4, fixed_abs, tag = 'smem constant byte address 0x4 - core index']
  #allocation1 [shape = 'u32[144,128]{1,0:T(1,128)}', space=vmem, size = 0x12000, scoped, tag = 'internal scratch']
  %s0 = inlined_call_operand.hbm [shape: bf16[8,32], index: 0, kind: input, shape index: {}]
  %s1 = inlined_call_operand.hbm [shape: bf16[32,128], index: 1, kind: input, shape index: {}]
  %s2 = inlined_call_operand.vmem [shape: f32[1,128], index: 2, kind: input, shape index: {}]
  %s3 = inlined_call_operand.vmem [shape: f32[1,128], index: 3, kind: input, shape index: {}]
  %s4 = inlined_call_operand.vmem [shape: f32[1,128], index: 4, kind: input, shape index: {}]
  %s5 = inlined_call_operand.hbm [shape: f32[128,128], index: 5, kind: input, shape index: {}]
  %s6 = inlined_call_operand.vmem [shape: f32[1,128], index: 6, kind: input, shape index: {}]
  %s7 = inlined_call_operand.vmem [shape: f32[1,128], index: 7, kind: input, shape index: {}]
  %s8 = inlined_call_operand.vmem [shape: f32[1,128], index: 8, kind: input, shape index: {}]
  %s9 = inlined_call_operand.vmem [shape: f32[10,128], index: 9, kind: input, shape index: {}]
  %s10 = inlined_call_operand.vmem [shape: f32[1,10], index: 10, kind: input, shape index: {}]
  %s11 = inlined_call_operand.hbm [shape: f32[8,10], index: 11, kind: output, shape index: {}]
  %s12 = sld [smem:[#allocation0]]
  $region66: #{tpu_custom_call.1} parent=0
    _
  %s14 = ssub.s32 1, %s12
  %s15 = scalar_select 0, %s14, %s12
  $region1: #{tpu_custom_call.1} parent=0
    #allocation2 [shape = 'u8[2048]{0}', space=vmem, size = 0x800, scoped, tag = 'input window, operand 0, single buffered']
    #allocation3 [shape = 's32[1]{0}', space=sflag, size = 0x4, scoped, tag = 'scoped memory for tpu_custom_call.1']
    #allocation4 [shape = 's32[1]{0}', space=sflag, size = 0x4, scoped, tag = 'scoped memory for tpu_custom_call.1']
    #allocation5 [shape = 'u8[8192]{0}', space=vmem, size = 0x2000, scoped, tag = 'input window, operand 1, single buffered']
    #allocation6 [shape = 's32[1]{0}', space=sflag, size = 0x4, scoped, tag = 'scoped memory for tpu_custom_call.1']
    #allocation7 [shape = 'u8[65536]{0}', space=vmem, size = 0x10000, scoped, tag = 'input window, operand 5, single buffered']
    #allocation8 [shape = 'u8[4096]{0}', space=vmem, size = 0x1000, scoped, tag = 'output window, operand 0, single buffered']
    %16 = vsyncpa [#allocation3], 0
    %17 = vsyncpa [#allocation6], 0
    %18 = vsyncpa [#allocation4], 0
    // Predicated region
    $region2: #{tpu_custom_call.1} parent=1 // pred_check
      _
    $region3: #{tpu_custom_call.1} parent=1 // pred_check_branch
      %20 = sbr.rel (0) target = $region5
    $region4: #{tpu_custom_call.1} parent=1 // pred_region
      %s22 = ssub.s32 64, 64
      %23 = vsyncadd [#allocation3], %s22
      %s25 = sshll.u32 [#allocation2], 4
      %s26 = int_to_ptr.vmem [resolvable:$true] %s25
      %28 = dma.hbm_to_vmem [thread:$0]  %s0, 64, %s26, [#allocation3]
    $region5: #{tpu_custom_call.1} parent=1 // pred_fallthru
      _
    // Predicated region
    $region6: #{tpu_custom_call.1} parent=1 // pred_check
      _
    $region7: #{tpu_custom_call.1} parent=1 // pred_check_branch
      %30 = sbr.rel (0) target = $region9
    $region8: #{tpu_custom_call.1} parent=1 // pred_region
      %s32 = ssub.s32 256, 256
      %33 = vsyncadd [#allocation6], %s32
      %s34 = sshll.u32 [#allocation5], 4
      %s35 = int_to_ptr.vmem [resolvable:$true] %s34
      %40 = dma.hbm_to_vmem [thread:$0]  %s1, 256, %s35, [#allocation6], 64, 64, 4
    $region9: #{tpu_custom_call.1} parent=1 // pred_fallthru
      _
    // Predicated region
    $region10: #{tpu_custom_call.1} parent=1 // pred_check
      _
    $region11: #{tpu_custom_call.1} parent=1 // pred_check_branch
      %42 = sbr.rel (0) target = $region13
    $region12: #{tpu_custom_call.1} parent=1 // pred_region
      _
    $region13: #{tpu_custom_call.1} parent=1 // pred_fallthru
      _
    // Predicated region
    $region14: #{tpu_custom_call.1} parent=1 // pred_check
      _
    $region15: #{tpu_custom_call.1} parent=1 // pred_check_branch
      %44 = sbr.rel (0) target = $region17
    $region16: #{tpu_custom_call.1} parent=1 // pred_region
      _
    $region17: #{tpu_custom_call.1} parent=1 // pred_fallthru
      _
    // Predicated region
    $region18: #{tpu_custom_call.1} parent=1 // pred_check
      _
    $region19: #{tpu_custom_call.1} parent=1 // pred_check_branch
      %46 = sbr.rel (0) target = $region21
    $region20: #{tpu_custom_call.1} parent=1 // pred_region
      _
    $region21: #{tpu_custom_call.1} parent=1 // pred_fallthru
      _
    // Predicated region
    $region22: #{tpu_custom_call.1} parent=1 // pred_check
      _
    $region23: #{tpu_custom_call.1} parent=1 // pred_check_branch
      %48 = sbr.rel (0) target = $region25
    $region24: #{tpu_custom_call.1} parent=1 // pred_region
      %s50 = ssub.s32 2048, 2048
      %51 = vsyncadd [#allocation6], %s50
      %s52 = sshll.u32 [#allocation7], 4
      %s53 = int_to_ptr.vmem [resolvable:$true] %s52
      %58 = dma.hbm_to_vmem [thread:$0]  %s5, 2048, %s53, [#allocation6], 128, 128, 8
    $region25: #{tpu_custom_call.1} parent=1 // pred_fallthru
      _
    // Predicated region
    $region26: #{tpu_custom_call.1} parent=1 // pred_check
      _
    $region27: #{tpu_custom_call.1} parent=1 // pred_check_branch
      %60 = sbr.rel (0) target = $region29
    $region28: #{tpu_custom_call.1} parent=1 // pred_region
      _
    $region29: #{tpu_custom_call.1} parent=1 // pred_fallthru
      _
    // Predicated region
    $region30: #{tpu_custom_call.1} parent=1 // pred_check
      _
    $region31: #{tpu_custom_call.1} parent=1 // pred_check_branch
      %62 = sbr.rel (0) target = $region33
    $region32: #{tpu_custom_call.1} parent=1 // pred_region
      _
    $region33: #{tpu_custom_call.1} parent=1 // pred_fallthru
      _
    // Predicated region
    $region34: #{tpu_custom_call.1} parent=1 // pred_check
      _
    $region35: #{tpu_custom_call.1} parent=1 // pred_check_branch
      %64 = sbr.rel (0) target = $region37
    $region36: #{tpu_custom_call.1} parent=1 // pred_region
      _
    $region37: #{tpu_custom_call.1} parent=1 // pred_fallthru
      _
    // Predicated region
    $region38: #{tpu_custom_call.1} parent=1 // pred_check
      _
    $region39: #{tpu_custom_call.1} parent=1 // pred_check_branch
      %66 = sbr.rel (0) target = $region41
    $region40: #{tpu_custom_call.1} parent=1 // pred_region
      _
    $region41: #{tpu_custom_call.1} parent=1 // pred_fallthru
      _
    // Predicated region
    $region42: #{tpu_custom_call.1} parent=1 // pred_check
      _
    $region43: #{tpu_custom_call.1} parent=1 // pred_check_branch
      %68 = sbr.rel (0) target = $region45
    $region44: #{tpu_custom_call.1} parent=1 // pred_region
      _
    $region45: #{tpu_custom_call.1} parent=1 // pred_fallthru
      _
    // Predicated region
    $region46: #{tpu_custom_call.1} parent=1 // pred_check
      _
    $region47: #{tpu_custom_call.1} parent=1 // pred_check_branch
      %70 = sbr.rel (0) target = $region49
    $region48: #{tpu_custom_call.1} parent=1 // pred_region
      %71 = dma.done [#allocation3], 64
    $region49: #{tpu_custom_call.1} parent=1 // pred_fallthru
      _
    // Predicated region
    $region50: #{tpu_custom_call.1} parent=1 // pred_check
      _
    $region51: #{tpu_custom_call.1} parent=1 // pred_check_branch
      %73 = sbr.rel (0) target = $region53
    $region52: #{tpu_custom_call.1} parent=1 // pred_region
      %74 = dma.done [#allocation6], 256
    $region53: #{tpu_custom_call.1} parent=1 // pred_fallthru
      _
    // Predicated region
    $region54: #{tpu_custom_call.1} parent=1 // pred_check
      _
    $region55: #{tpu_custom_call.1} parent=1 // pred_check_branch
      %76 = sbr.rel (0) target = $region57
    $region56: #{tpu_custom_call.1} parent=1 // pred_region
      %77 = dma.done [#allocation6], 2048
    $region57: #{tpu_custom_call.1} parent=1 // pred_fallthru
      _
    %v79 = vld [vmem:[#allocation2] sm:$0xf]
    %v80 = vld [vmem:[#allocation5] sm:$0xf]
    %v81 = vld [vmem:[#allocation5 + $0x4] sm:$0xf]
    %v82 = vld [vmem:[#allocation5 + $0x8] sm:$0xf]
    %v83 = vld [vmem:[#allocation5 + $0xc] sm:$0xf]
    %v84 = vld [vmem:[%s2] sm:$0x1]
    %v86 = vlaneseq
    %v87 = vshrl.u32 %v86, 7
    %v88 = vsub.s32 0, %v87
    %v89 = vrot.slane %v84, %v88
    %v95 = vunpack.c.l.b16 %v80
    %v96 = vunpack.c.l.b16 %v81
    %v97 = vunpack.c.l.b16 %v82
    %v98 = vunpack.c.l.b16 %v83
    %v99 = vpack.c.b16 %v96, %v95
    %v100 = vpack.c.b16 %v98, %v97
    %vm103 = vcmask 261120
    %v105 = vsel %vm103, %v79, 0
    %107 = vmatprep.subr.bf16.mxu0 0
    %108 = vmatpush1.bf16.msra.mxu0 %v99
    %109 = vmatprep.subr.bf16.mxu0 0
    %110 = vmatpush1.bf16.msra.mxu0 %v100
    %111 = vmatprep.subr.bf16.mxu0 0
    %112 = vmatpush1.bf16.msra.mxu0 0
    %113 = vmatprep.subr.bf16.mxu0 0
    %114 = vmatpush1.bf16.msra.mxu0 0
    %115 = vmatprep.subr.bf16.mxu0 0
    %116 = vmatpush1.bf16.msra.mxu0 0
    %117 = vmatprep.subr.bf16.mxu0 0
    %118 = vmatpush1.bf16.msra.mxu0 0
    %119 = vmatprep.subr.bf16.mxu0 0
    %120 = vmatpush1.bf16.msra.mxu0 0
    %121 = vmatprep.subr.bf16.mxu0 0
    %122 = vmatpush1.bf16.msra.mxu0 0
    %123 = vmatprep.subr.bf16.mxu0 0
    %124 = vmatpush1.bf16.msra.mxu0 0
    %125 = vmatprep.subr.bf16.mxu0 0
    %126 = vmatpush1.bf16.msra.mxu0 0
    %127 = vmatprep.subr.bf16.mxu0 0
    %128 = vmatpush1.bf16.msra.mxu0 0
    %129 = vmatprep.subr.bf16.mxu0 0
    %130 = vmatpush1.bf16.msra.mxu0 0
    %131 = vmatprep.subr.bf16.mxu0 0
    %132 = vmatpush1.bf16.msra.mxu0 0
    %133 = vmatprep.subr.bf16.mxu0 0
    %134 = vmatpush1.bf16.msra.mxu0 0
    %135 = vmatprep.subr.bf16.mxu0 0
    %136 = vmatpush1.bf16.msra.mxu0 0
    %137 = vmatprep.subr.bf16.mxu0 0
    %138 = vmatpush1.bf16.msra.mxu0 0
    %139 = vmatprep.mubr.bf16.mxu0 0
    %140 = vmatmul.mubr.bf16.gmra.mrb[0].mxu0 %v105
    %v141 = vpop.f32.mrb[0].mxu0
    %v142 = vadd.f32 %v89, %v141
    %v143 = vpop.f32.mrb[0].mxu0
    %v144 = vpop.f32.mrb[0].mxu0
    %v145 = vpop.f32.mrb[0].mxu0
    %146 = vdwg.mxu0
    %v147 = vmax.f32 %v142, 0.0
    %v148 = vld [vmem:[%s3] sm:$0x1]
    %v149 = vld [vmem:[%s4] sm:$0x1]
    %v150 = vld [vmem:[#allocation7] sm:$0xff]
    %v151 = vld [vmem:[#allocation7 + $0x8] sm:$0xff]
    %v152 = vld [vmem:[#allocation7 + $0x10] sm:$0xff]
    %v153 = vld [vmem:[#allocation7 + $0x18] sm:$0xff]
    %v154 = vld [vmem:[#allocation7 + $0x20] sm:$0xff]
    %v155 = vld [vmem:[#allocation7 + $0x28] sm:$0xff]
    %v156 = vld [vmem:[#allocation7 + $0x30] sm:$0xff]
    %v157 = vld [vmem:[#allocation7 + $0x38] sm:$0xff]
    %v158 = vld [vmem:[#allocation7 + $0x40] sm:$0xff]
    %v159 = vld [vmem:[#allocation7 + $0x48] sm:$0xff]
    %v160 = vld [vmem:[#allocation7 + $0x50] sm:$0xff]
    %v161 = vld [vmem:[#allocation7 + $0x58] sm:$0xff]
    %v162 = vld [vmem:[#allocation7 + $0x60] sm:$0xff]
    %v163 = vld [vmem:[#allocation7 + $0x68] sm:$0xff]
    %v164 = vld [vmem:[#allocation7 + $0x70] sm:$0xff]
    %v165 = vld [vmem:[#allocation7 + $0x78] sm:$0xff]
    %v166 = vld [vmem:[%s6] sm:$0x1]
    %v167 = vrot.slane %v147, 4
    %v168 = vadd.f32 %v147, %v167
    %v169 = vrot.slane %v168, 2
    %v170 = vadd.f32 %v168, %v169
    %v171 = vrot.slane %v170, 1
    %v172 = vadd.f32 %v170, %v171
    %v173 = vmul.f32 %v172, 0.125
    %v174 = vsub.f32 %v147, %v173
    %v175 = vmul.f32 %v174, %v174
    %v176 = vrot.slane %v175, 4
    %v177 = vadd.f32 %v175, %v176
    %v178 = vrot.slane %v177, 2
    %v179 = vadd.f32 %v177, %v178
    %v180 = vrot.slane %v179, 1
    %v181 = vadd.f32 %v179, %v180
    %v182 = vmul.f32 %v181, 0.125
    %v183 = vadd.f32 %v182, 1e-05
    %v184 = vrsqrt.pop %v183
    %v185 = vmul.f32 %v148, %v184
    %v186 = vmul.f32 %v173, %v185
    %v187 = vsub.f32 %v149, %v186
    %v189 = vlaneseq
    %v190 = vshrl.u32 %v189, 7
    %v191 = vsub.s32 0, %v190
    %v192 = vrot.slane %v185, %v191
    %v194 = vmul.f32 %v150, %v192
    %v195 = vmul.f32 %v151, %v192
    %v196 = vmul.f32 %v152, %v192
    %v197 = vmul.f32 %v153, %v192
    %v198 = vmul.f32 %v154, %v192
    %v199 = vmul.f32 %v155, %v192
    %v200 = vmul.f32 %v156, %v192
    %v201 = vmul.f32 %v157, %v192
    %v202 = vmul.f32 %v158, %v192
    %v203 = vmul.f32 %v159, %v192
    %v204 = vmul.f32 %v160, %v192
    %v205 = vmul.f32 %v161, %v192
    %v206 = vmul.f32 %v162, %v192
    %v207 = vmul.f32 %v163, %v192
    %v208 = vmul.f32 %v164, %v192
    %v209 = vmul.f32 %v165, %v192
    %v210 = vpack.c.bf16 %v187, %v187
    %v211 = vpack.c.bf16 %v151, %v150
    %v212 = vpack.c.bf16 %v153, %v152
    %v213 = vpack.c.bf16 %v155, %v154
    %v214 = vpack.c.bf16 %v157, %v156
    %v215 = vpack.c.bf16 %v159, %v158
    %v216 = vpack.c.bf16 %v161, %v160
    %v217 = vpack.c.bf16 %v163, %v162
    %v218 = vpack.c.bf16 %v165, %v164
    %219 = vmatprep.subr.bf16.mxu0 0
    %220 = vmatpush1.bf16.xpose.msra.mxu0 %v211
    %221 = vmatprep.subr.bf16.mxu0 0
    %222 = vmatpush1.bf16.xpose.msra.mxu0 %v212
    %223 = vmatprep.subr.bf16.mxu0 0
    %224 = vmatpush1.bf16.xpose.msra.mxu0 %v213
    %225 = vmatprep.subr.bf16.mxu0 0
    %226 = vmatpush1.bf16.xpose.msra.mxu0 %v214
    %227 = vmatprep.subr.bf16.mxu0 0
    %228 = vmatpush1.bf16.xpose.msra.mxu0 %v215
    %229 = vmatprep.subr.bf16.mxu0 0
    %230 = vmatpush1.bf16.xpose.msra.mxu0 %v216
    %231 = vmatprep.subr.bf16.mxu0 0
    %232 = vmatpush1.bf16.xpose.msra.mxu0 %v217
    %233 = vmatprep.subr.bf16.mxu0 0
    %234 = vmatpush1.bf16.xpose.msra.mxu0 %v218
    %235 = vmatprep.subr.bf16.mxu0 0
    %236 = vmatpush1.bf16.xpose.msra.mxu0 0
    %237 = vmatprep.subr.bf16.mxu0 0
    %238 = vmatpush1.bf16.xpose.msra.mxu0 0
    %239 = vmatprep.subr.bf16.mxu0 0
    %240 = vmatpush1.bf16.xpose.msra.mxu0 0
    %241 = vmatprep.subr.bf16.mxu0 0
    %242 = vmatpush1.bf16.xpose.msra.mxu0 0
    %243 = vmatprep.subr.bf16.mxu0 0
    %244 = vmatpush1.bf16.xpose.msra.mxu0 0
    %245 = vmatprep.subr.bf16.mxu0 0
    %246 = vmatpush1.bf16.xpose.msra.mxu0 0
    %247 = vmatprep.subr.bf16.mxu0 0
    %248 = vmatpush1.bf16.xpose.msra.mxu0 0
    %249 = vmatprep.subr.bf16.mxu0 0
    %250 = vmatpush1.bf16.xpose.msra.mxu0 0
    %251 = vmatprep.mubr.bf16.mxu0 0
    %252 = vmatmul.mubr.bf16.gmra.mrb[0].mxu0 %v210
    %v253 = vpop.f32.mrb[0].mxu0
    %v254 = vadd.f32 %v166, %v253
    %v255 = vpop.f32.mrb[0].mxu0
    %v256 = vpop.f32.mrb[0].mxu0
    %v257 = vpop.f32.mrb[0].mxu0
    %258 = vdwg.mxu0
    %v259 = vpack.c.bf16 %v147, %v147
    %v260 = vpack.c.bf16 %v195, %v194
    %v261 = vpack.c.bf16 %v197, %v196
    %v262 = vpack.c.bf16 %v199, %v198
    %v263 = vpack.c.bf16 %v201, %v200
    %v264 = vpack.c.bf16 %v203, %v202
    %v265 = vpack.c.bf16 %v205, %v204
    %v266 = vpack.c.bf16 %v207, %v206
    %v267 = vpack.c.bf16 %v209, %v208
    %v268 = vlaneseq
    %v269 = vshrl.u32 %v268, 7
    %v270 = vsub.s32 0, %v269
    %v271 = vrot.slane %v254, %v270
    %272 = vmatprep.subr.bf16.mxu0 0
    %273 = vmatpush1.bf16.xpose.msra.mxu0 %v260
    %274 = vmatprep.subr.bf16.mxu0 0
    %275 = vmatpush1.bf16.xpose.msra.mxu0 %v261
    %276 = vmatprep.subr.bf16.mxu0 0
    %277 = vmatpush1.bf16.xpose.msra.mxu0 %v262
    %278 = vmatprep.subr.bf16.mxu0 0
    %279 = vmatpush1.bf16.xpose.msra.mxu0 %v263
    %280 = vmatprep.subr.bf16.mxu0 0
    %281 = vmatpush1.bf16.xpose.msra.mxu0 %v264
    %282 = vmatprep.subr.bf16.mxu0 0
    %283 = vmatpush1.bf16.xpose.msra.mxu0 %v265
    %284 = vmatprep.subr.bf16.mxu0 0
    %285 = vmatpush1.bf16.xpose.msra.mxu0 %v266
    %286 = vmatprep.subr.bf16.mxu0 0
    %287 = vmatpush1.bf16.xpose.msra.mxu0 %v267
    %288 = vmatprep.subr.bf16.mxu0 0
    %289 = vmatpush1.bf16.xpose.msra.mxu0 0
    %290 = vmatprep.subr.bf16.mxu0 0
    %291 = vmatpush1.bf16.xpose.msra.mxu0 0
    %292 = vmatprep.subr.bf16.mxu0 0
    %293 = vmatpush1.bf16.xpose.msra.mxu0 0
    %294 = vmatprep.subr.bf16.mxu0 0
    %295 = vmatpush1.bf16.xpose.msra.mxu0 0
    %296 = vmatprep.subr.bf16.mxu0 0
    %297 = vmatpush1.bf16.xpose.msra.mxu0 0
    %298 = vmatprep.subr.bf16.mxu0 0
    %299 = vmatpush1.bf16.xpose.msra.mxu0 0
    %300 = vmatprep.subr.bf16.mxu0 0
    %301 = vmatpush1.bf16.xpose.msra.mxu0 0
    %302 = vmatprep.subr.bf16.mxu0 0
    %303 = vmatpush1.bf16.xpose.msra.mxu0 0
    %304 = vmatprep.mubr.bf16.mxu0 0
    %305 = vmatmul.mubr.bf16.gmra.mrb[0].mxu0 %v259
    %v306 = vpop.f32.mrb[0].mxu0
    %v307 = vadd.f32 %v271, %v306
    %v308 = vpop.f32.mrb[0].mxu0
    %v309 = vpop.f32.mrb[0].mxu0
    %v310 = vpop.f32.mrb[0].mxu0
    %311 = vdwg.mxu0
    %v312 = vmax.f32 %v307, 0.0
    %v313 = vld [vmem:[%s7] sm:$0x1]
    %v314 = vld [vmem:[%s8] sm:$0x1]
    %v315 = vld [vmem:[%s9] sm:$0xff]
    %v316 = vld [vmem:[%s9 + $0x8] sm:$0x3]
    %v317 = vld [vmem:[%s10] sm:$0x1]
    %v318 = vrot.slane %v312, 4
    %v319 = vadd.f32 %v312, %v318
    %v320 = vrot.slane %v319, 2
    %v321 = vadd.f32 %v319, %v320
    %v322 = vrot.slane %v321, 1
    %v323 = vadd.f32 %v321, %v322
    %v324 = vmul.f32 %v323, 0.125
    %v325 = vsub.f32 %v312, %v324
    %v326 = vmul.f32 %v325, %v325
    %v327 = vrot.slane %v326, 4
    %v328 = vadd.f32 %v326, %v327
    %v329 = vrot.slane %v328, 2
    %v330 = vadd.f32 %v328, %v329
    %v331 = vrot.slane %v330, 1
    %v332 = vadd.f32 %v330, %v331
    %v333 = vmul.f32 %v332, 0.125
    %v334 = vadd.f32 %v333, 1e-05
    %v335 = vrsqrt.pop %v334
    %v336 = vmul.f32 %v313, %v335
    %v337 = vmul.f32 %v324, %v336
    %v338 = vsub.f32 %v314, %v337
    %v340 = vlaneseq
    %v341 = vshrl.u32 %v340, 7
    %v342 = vsub.s32 0, %v341
    %v343 = vrot.slane %v336, %v342
    %v345 = vmul.f32 %v315, %v343
    %v346 = vmul.f32 %v316, %v343
    %v347 = vpack.c.bf16 %v338, %v338
    %v348 = vpack.c.bf16 %v316, %v315
    %349 = vmatprep.subr.bf16.mxu0 0
    %350 = vmatpush1.bf16.xpose.msra.mxu0 %v348
    %351 = vmatprep.subr.bf16.mxu0 0
    %352 = vmatpush1.bf16.xpose.msra.mxu0 0
    %353 = vmatprep.subr.bf16.mxu0 0
    %354 = vmatpush1.bf16.xpose.msra.mxu0 0
    %355 = vmatprep.subr.bf16.mxu0 0
    %356 = vmatpush1.bf16.xpose.msra.mxu0 0
    %357 = vmatprep.subr.bf16.mxu0 0
    %358 = vmatpush1.bf16.xpose.msra.mxu0 0
    %359 = vmatprep.subr.bf16.mxu0 0
    %360 = vmatpush1.bf16.xpose.msra.mxu0 0
    %361 = vmatprep.subr.bf16.mxu0 0
    %362 = vmatpush1.bf16.xpose.msra.mxu0 0
    %363 = vmatprep.subr.bf16.mxu0 0
    %364 = vmatpush1.bf16.xpose.msra.mxu0 0
    %365 = vmatprep.subr.bf16.mxu0 0
    %366 = vmatpush1.bf16.xpose.msra.mxu0 0
    %367 = vmatprep.subr.bf16.mxu0 0
    %368 = vmatpush1.bf16.xpose.msra.mxu0 0
    %369 = vmatprep.subr.bf16.mxu0 0
    %370 = vmatpush1.bf16.xpose.msra.mxu0 0
    %371 = vmatprep.subr.bf16.mxu0 0
    %372 = vmatpush1.bf16.xpose.msra.mxu0 0
    %373 = vmatprep.subr.bf16.mxu0 0
    %374 = vmatpush1.bf16.xpose.msra.mxu0 0
    %375 = vmatprep.subr.bf16.mxu0 0
    %376 = vmatpush1.bf16.xpose.msra.mxu0 0
    %377 = vmatprep.subr.bf16.mxu0 0
    %378 = vmatpush1.bf16.xpose.msra.mxu0 0
    %379 = vmatprep.subr.bf16.mxu0 0
    %380 = vmatpush1.bf16.xpose.msra.mxu0 0
    %381 = vmatprep.mubr.bf16.mxu0 0
    %382 = vmatmul.mubr.bf16.gmra.mrb[0].mxu0 %v347
    %v383 = vpop.f32.mrb[0].mxu0
    %v384 = vadd.f32 %v317, %v383
    %v385 = vpop.f32.mrb[0].mxu0
    %v386 = vpop.f32.mrb[0].mxu0
    %v387 = vpop.f32.mrb[0].mxu0
    %388 = vdwg.mxu0
    %v389 = vpack.c.bf16 %v312, %v312
    %v390 = vpack.c.bf16 %v346, %v345
    %v391 = vlaneseq
    %v392 = vshrl.u32 %v391, 7
    %v393 = vsub.s32 0, %v392
    %v394 = vrot.slane %v384, %v393
    %395 = vmatprep.subr.bf16.mxu0 0
    %396 = vmatpush1.bf16.xpose.msra.mxu0 %v390
    %397 = vmatprep.subr.bf16.mxu0 0
    %398 = vmatpush1.bf16.xpose.msra.mxu0 0
    %399 = vmatprep.subr.bf16.mxu0 0
    %400 = vmatpush1.bf16.xpose.msra.mxu0 0
    %401 = vmatprep.subr.bf16.mxu0 0
    %402 = vmatpush1.bf16.xpose.msra.mxu0 0
    %403 = vmatprep.subr.bf16.mxu0 0
    %404 = vmatpush1.bf16.xpose.msra.mxu0 0
    %405 = vmatprep.subr.bf16.mxu0 0
    %406 = vmatpush1.bf16.xpose.msra.mxu0 0
    %407 = vmatprep.subr.bf16.mxu0 0
    %408 = vmatpush1.bf16.xpose.msra.mxu0 0
    %409 = vmatprep.subr.bf16.mxu0 0
    %410 = vmatpush1.bf16.xpose.msra.mxu0 0
    %411 = vmatprep.subr.bf16.mxu0 0
    %412 = vmatpush1.bf16.xpose.msra.mxu0 0
    %413 = vmatprep.subr.bf16.mxu0 0
    %414 = vmatpush1.bf16.xpose.msra.mxu0 0
    %415 = vmatprep.subr.bf16.mxu0 0
    %416 = vmatpush1.bf16.xpose.msra.mxu0 0
    %417 = vmatprep.subr.bf16.mxu0 0
    %418 = vmatpush1.bf16.xpose.msra.mxu0 0
    %419 = vmatprep.subr.bf16.mxu0 0
    %420 = vmatpush1.bf16.xpose.msra.mxu0 0
    %421 = vmatprep.subr.bf16.mxu0 0
    %422 = vmatpush1.bf16.xpose.msra.mxu0 0
    %423 = vmatprep.subr.bf16.mxu0 0
    %424 = vmatpush1.bf16.xpose.msra.mxu0 0
    %425 = vmatprep.subr.bf16.mxu0 0
    %426 = vmatpush1.bf16.xpose.msra.mxu0 0
    %427 = vmatprep.mubr.bf16.mxu0 0
    %428 = vmatmul.mubr.bf16.gmra.mrb[0].mxu0 %v389
    %v429 = vpop.f32.mrb[0].mxu0
    %v430 = vadd.f32 %v394, %v429
    %v431 = vpop.f32.mrb[0].mxu0
    %v432 = vpop.f32.mrb[0].mxu0
    %v433 = vpop.f32.mrb[0].mxu0
    %434 = vdwg.mxu0
    %vm435 = vcmask 80896
    %436 = vst.msk [vmem:[#allocation8] sm:$0xff] %vm435, %v430
    // Predicated region
    $region58: #{tpu_custom_call.1} parent=1 // pred_check
      _
    $region59: #{tpu_custom_call.1} parent=1 // pred_check_branch
      %438 = sbr.rel (0) target = $region61
    $region60: #{tpu_custom_call.1} parent=1 // pred_region
      %s440 = ssub.s32 128, 128
      %441 = vsyncadd [#allocation4], %s440
      %s443 = sshll.u32 [#allocation8], 4
      %s444 = int_to_ptr.vmem [resolvable:$true] %s443
      %446 = dma.vmem_to_hbm [thread:$0]  %s444, 128, %s11, [#allocation4]
    $region61: #{tpu_custom_call.1} parent=1 // pred_fallthru
      _
    // Predicated region
    $region62: #{tpu_custom_call.1} parent=1 // pred_check
      _
    $region63: #{tpu_custom_call.1} parent=1 // pred_check_branch
      %448 = sbr.rel (0) target = $region65
    $region64: #{tpu_custom_call.1} parent=1 // pred_region
      %449 = dma.done [#allocation4], 128
    $region65: #{tpu_custom_call.1} parent=1 // pred_fallthru
      _
    %450 = vsyncpa [#allocation3], 1
    %451 = vsyncpa [#allocation6], 1
    %452 = vsyncpa [#allocation4], 1

</llo_original>
